<compile_context>
chip_gen: v6e
topology: v6e:2x2x1
jax: 0.10.0
libtpu: 0.0.40
codegen_flags: <defaults>
</compile_context>

<pallas_src>
import jax
import jax.numpy as jnp
from jax import lax
from jax.experimental import pallas as pl
from jax.experimental.pallas import tpu as pltpu


def _round_up(x, m):
    return ((x + m - 1) // m) * m


# --------------------------- rollout (batched) kernel ----------------------- #
def _mh_matmul_tanh_kernel(x_ref, w_ref, b_ref, o_ref):
    """o = tanh(x @ w + b) for one M-block.

    x_ref: (Mblk, K)  bf16   im2col'd delay windows (K = ndelay*dim)
    w_ref: (K, Hp)    bf16   resident across the grid (constant index_map)
    b_ref: (1, Hp)    f32    resident
    o_ref: (Mblk, Hp) bf16   lane-dense output block
    """
    acc = jnp.dot(x_ref[...], w_ref[...], preferred_element_type=jnp.float32)
    o_ref[...] = jnp.tanh(acc + b_ref[...]).astype(o_ref.dtype)


def mh_readout(x_flat, w_flat, b_pad, *, m_block=512):
    """tanh(x_flat @ w_flat + b_pad) with an M-blocked time grid.

    x_flat: (M, K)  bf16  (M = T*B rows of flattened delay windows)
    w_flat: (K, Hp) bf16
    b_pad:  (1, Hp) f32
    returns (M, Hp) bf16
    """
    M, K = x_flat.shape
    Hp = w_flat.shape[1]
    mb = min(m_block, _round_up(M, 16))          # bf16 sublane-friendly block
    m_pad = _round_up(M, mb)
    if m_pad != M:
        x_flat = jnp.pad(x_flat, ((0, m_pad - M), (0, 0)))
    out = pl.pallas_call(
        _mh_matmul_tanh_kernel,
        out_shape=jax.ShapeDtypeStruct((m_pad, Hp), jnp.bfloat16),
        grid=(m_pad // mb,),
        in_specs=[
            pl.BlockSpec((mb, K), lambda i: (i, 0)),
            pl.BlockSpec((K, Hp), lambda i: (0, 0)),   # resident weights
            pl.BlockSpec((1, Hp), lambda i: (0, 0)),   # resident bias
        ],
        out_specs=pl.BlockSpec((mb, Hp), lambda i: (i, 0)),
        compiler_params=pltpu.CompilerParams(
            dimension_semantics=("parallel",),         # shards M-blocks on v7x
            vmem_limit_bytes=32 * 1024 * 1024,
        ),
    )(x_flat, w_flat, b_pad)
    return out[:M]


# ------------------------- stateful per-step kernel ------------------------- #
def _mh_ring_step_kernel(rot_ref, buf_ref, w_ref, b_ref, o_ref):
    """One moving-horizon step directly from a ring buffer.

    rot_ref: (1,)             int32 SMEM  index of the OLDEST row in the ring
    buf_ref: (ndelay, B, D)   bf16        ring buffer (physical slot order)
    w_ref:   (ndelay, D, Hp)  bf16        per-delay weight slabs (chronological)
    b_ref:   (1, Hp)          f32
    o_ref:   (B, Hp)          bf16
    """
    ndelay = buf_ref.shape[0]
    B = buf_ref.shape[1]
    Hp = w_ref.shape[2]
    rot = rot_ref[0]
    acc = jnp.zeros((B, Hp), jnp.float32)
    for n in range(ndelay):                       # static unroll; ndelay small
        slot = rot + n
        slot = jnp.where(slot >= ndelay, slot - ndelay, slot)
        acc = acc + jnp.dot(buf_ref[slot], w_ref[n],
                            preferred_element_type=jnp.float32)
    o_ref[...] = jnp.tanh(acc + b_ref[...]).astype(o_ref.dtype)


def mh_ring_step(buf, rot, w_slab, b_pad):
    ndelay, B, D = buf.shape
    Hp = w_slab.shape[2]
    return pl.pallas_call(
        _mh_ring_step_kernel,
        out_shape=jax.ShapeDtypeStruct((B, Hp), jnp.bfloat16),
        in_specs=[
            pl.BlockSpec(memory_space=pltpu.MemorySpace.SMEM),
            pl.BlockSpec(memory_space=pltpu.MemorySpace.VMEM),
            pl.BlockSpec(memory_space=pltpu.MemorySpace.VMEM),
            pl.BlockSpec(memory_space=pltpu.MemorySpace.VMEM),
        ],
        out_specs=pl.BlockSpec(memory_space=pltpu.MemorySpace.VMEM),
    )(rot, buf, w_slab, b_pad)


# ------------------------- synthetic wrapped module ------------------------ #
class LinearTanhModule:
    """Wrapped module: {x: (ndelay, batch, dim)} -> {y: (batch, hidden)}.

    Equivalent to flattening the delay window per batch element (oldest first)
    and applying Linear(ndelay*dim -> hidden) + tanh.
    """

    input_keys = ["x"]
    output_keys = ["y"]

    def __init__(self, ndelay, dim, hidden, key):
        self.ndelay, self.dim, self.hidden = ndelay, dim, hidden
        self.hidden_pad = _round_up(hidden, 128)      # lane-dense output stores

        kw, kb = jax.random.split(key)
        k_in = ndelay * dim
        scale = 1.0 / jnp.sqrt(jnp.float32(k_in))
        # f32 reference parameters (used for the numerics cross-check)
        self.w_ref = (jax.random.uniform(kw, (k_in, hidden), jnp.float32) * 2.0 - 1.0) * scale
        self.b_ref = (jax.random.uniform(kb, (1, hidden), jnp.float32) * 2.0 - 1.0) * scale

        # Kernel parameters, prepared ONCE: pad hidden -> Hp, cast to bf16.
        w_pad = jnp.zeros((k_in, self.hidden_pad), jnp.float32).at[:, :hidden].set(self.w_ref)
        self.w_flat = w_pad.astype(jnp.bfloat16)                               # (K, Hp)
        self.w_slab = w_pad.reshape(ndelay, dim, self.hidden_pad).astype(jnp.bfloat16)
        self.b_pad = jnp.zeros((1, self.hidden_pad), jnp.float32).at[:, :hidden].set(self.b_ref)

        self._rollout_jit = jax.jit(self._rollout_impl)

    # original module contract: chronological 3-d window per key
    def __call__(self, inputs):
        x = inputs["x"].astype(jnp.bfloat16)                    # (ndelay, B, D)
        rot0 = jnp.zeros((1,), jnp.int32)
        y = mh_ring_step(x, rot0, self.w_slab, self.b_pad)
        return {"y": y[:, : self.hidden].astype(jnp.float32)}

    # ring-buffer entry point used by MovingHorizon (avoids window rebuilds)
    def ring_step(self, bufs, rot):
        y = mh_ring_step(bufs["x"], rot, self.w_slab, self.b_pad)
        return {"y": y[:, : self.hidden].astype(jnp.float32)}

    def _rollout_impl(self, seq):
        """All T steps in one pallas_call (MovingHorizon-from-empty semantics)."""
        T, B, D = seq.shape
        first = jnp.broadcast_to(seq[:1], (self.ndelay - 1, B, D))
        padded = jnp.concatenate([first, seq], axis=0).astype(jnp.bfloat16)  # pre-cast
        idx = jnp.arange(T)[:, None] + jnp.arange(self.ndelay)[None, :]      # (T, ndelay)
        win = padded[idx]                                        # (T, ndelay, B, D)
        x = jnp.transpose(win, (0, 2, 1, 3)).reshape(T * B, self.ndelay * D)
        y = mh_readout(x, self.w_flat, self.b_pad)               # (T*B, Hp) bf16
        y = y.reshape(T, B, self.hidden_pad)[:, :, : self.hidden]
        return y.astype(jnp.float32)

    def rollout(self, seq):
        return self._rollout_jit(seq)


# -------------------------------- MovingHorizon ---------------------------- #
class MovingHorizon:
    """JAX port of neuromancer.system.MovingHorizon forward semantics.

    History is a device-resident ring buffer (ndelay, batch, dim) per input
    key, updated in place with a rolling write index (buffer donation); each
    forward() is a single jitted dispatch ending in the Pallas step kernel.
    """

    def __init__(self, module, ndelay=1, history=None):
        self.input_keys, self.output_keys = module.input_keys, module.output_keys
        self.ndelay, self.module = ndelay, module
        self._buf = {k: None for k in self.input_keys}
        self._p = jnp.zeros((), jnp.int32)        # next slot to overwrite (oldest)
        if history is not None:
            for k in self.input_keys:
                steps = [jnp.asarray(s) for s in history.get(k, [])]
                if steps:
                    if len(steps) < ndelay:
                        # TODO(synk): original stacks a shorter window until ndelay
                        # real steps have been seen; we front-pad with the oldest
                        # entry to keep a fixed-size ring buffer.
                        steps = [steps[0]] * (ndelay - len(steps)) + steps
                    self._buf[k] = jnp.stack(steps[-ndelay:]).astype(jnp.bfloat16)
        self._step = jax.jit(self._step_impl, donate_argnums=(0,))

    def _step_impl(self, bufs, p, inputs):
        new_bufs = {}
        for k in self.input_keys:
            xb = inputs[k].astype(jnp.bfloat16)[None]
            # in-place overwrite of the oldest slot (buffers donated -> no copy)
            new_bufs[k] = lax.dynamic_update_slice(bufs[k], xb, (p, 0, 0))
        # after writing at p, the oldest row now lives at (p+1) % ndelay
        rot = jnp.reshape(jnp.mod(p + 1, self.ndelay), (1,)).astype(jnp.int32)
        out = self.module.ring_step(new_bufs, rot)
        p_next = jnp.mod(p + 1, self.ndelay).astype(jnp.int32)
        return new_bufs, p_next, out

    def forward(self, input):
        for k in self.input_keys:
            if self._buf[k] is None:
                # empty history: the first step is replicated ndelay times
                self._buf[k] = jnp.broadcast_to(
                    input[k].astype(jnp.bfloat16)[None],
                    (self.ndelay,) + input[k].shape,
                ).astype(jnp.bfloat16)
        self._buf, self._p, out = self._step(
            self._buf, self._p, {k: input[k] for k in self.input_keys}
        )
        return out


# ------------------------------------ main --------------------------------- #
if __name__ == "__main__":
    batch, dim, ndelay, hidden = 8, 16, 4, 32
    T = 6

    key = jax.random.PRNGKey(0)
    k_mod, k_seq = jax.random.split(key)

    inner = LinearTanhModule(ndelay, dim, hidden, k_mod)
    mh = MovingHorizon(inner, ndelay=ndelay)

    seq = jax.random.normal(k_seq, (T, batch, dim), jnp.float32)

    # stateful per-step path (matches the PyTorch forward semantics)
    step_ys = []
    for t in range(T):
        out = mh.forward({"x": seq[t]})
        step_ys.append(out["y"])
    y_steps = jax.block_until_ready(jnp.stack(step_ys))          # (T, batch, hidden)

    # batched path: all T steps in one pallas_call (M-blocked grid)
    y_roll = jax.block_until_ready(inner.rollout(seq))           # (T, batch, hidden)

    assert y_steps.shape == (T, batch, hidden) and y_steps.dtype == jnp.float32
    assert y_roll.shape == (T, batch, hidden)

    # pure-JAX reference reproducing the original window semantics; operands
    # cast to bf16 to mirror the MXU input precision (accumulation in f32).
    first = jnp.broadcast_to(seq[:1], (ndelay - 1, batch, dim))
    padded = jnp.concatenate([first, seq], axis=0)
    w16 = inner.w_ref.astype(jnp.bfloat16).astype(jnp.float32)
    refs = []
    for t in range(T):
        win = padded[t : t + ndelay]                             # (ndelay, batch, dim)
        xb = jnp.transpose(win, (1, 0, 2)).reshape(batch, ndelay * dim)
        xb16 = xb.astype(jnp.bfloat16).astype(jnp.float32)
        refs.append(jnp.tanh(xb16 @ w16 + inner.b_ref))
    y_ref = jnp.stack(refs)

    # kernel outputs are written in bf16 (lane-dense), hence the tolerances
    assert jnp.allclose(y_steps, y_ref, atol=2e-2, rtol=2e-2)
    assert jnp.allclose(y_roll, y_ref, atol=2e-2, rtol=2e-2)
    assert jnp.allclose(y_steps, y_roll, atol=2e-2, rtol=2e-2)

    print("KERNEL_OK")
</pallas_src>

<mosaic_0001>
module attributes {stable_mosaic.version = 11 : i64} {
  func.func @_mh_ring_step_kernel(%arg0: memref<1xi32, #tpu.memory_space<smem>>, %arg1: memref<4x8x16xbf16, #tpu.memory_space<vmem>>, %arg2: memref<4x16x128xbf16, #tpu.memory_space<vmem>>, %arg3: memref<1x128xf32, #tpu.memory_space<vmem>>, %arg4: memref<8x128xbf16, #tpu.memory_space<vmem>>) attributes {dimension_semantics = [], scalar_prefetch = 0 : i64, scratch_operands = 0 : i64, tpu.core_type = #tpu.core_type<tc>} {
    %c0 = arith.constant 0 : index
    %0 = memref.load %arg0[%c0] : memref<1xi32, #tpu.memory_space<smem>>
    %cst = arith.constant 0.000000e+00 : f32
    %1 = vector.broadcast %cst : f32 to vector<8x128xf32>
    %c0_i32 = arith.constant 0 : i32
    %2 = arith.addi %0, %c0_i32 : i32
    %c4_i32 = arith.constant 4 : i32
    %3 = arith.cmpi sge, %2, %c4_i32 : i32
    %c4_i32_0 = arith.constant 4 : i32
    %4 = arith.subi %2, %c4_i32_0 : i32
    %5 = arith.select %3, %4, %2 : i32
    %6 = arith.index_cast %5 : i32 to index
    %c0_1 = arith.constant 0 : index
    %c0_2 = arith.constant 0 : index
    %7 = vector.load %arg1[%6, %c0_1, %c0_2] : memref<4x8x16xbf16, #tpu.memory_space<vmem>>, vector<1x8x16xbf16>
    %8 = vector.shape_cast %7 : vector<1x8x16xbf16> to vector<8x16xbf16>
    %c0_3 = arith.constant 0 : index
    %c0_4 = arith.constant 0 : index
    %c0_5 = arith.constant 0 : index
    %9 = vector.load %arg2[%c0_3, %c0_4, %c0_5] : memref<4x16x128xbf16, #tpu.memory_space<vmem>>, vector<1x16x128xbf16>
    %10 = vector.shape_cast %9 : vector<1x16x128xbf16> to vector<16x128xbf16>
    %cst_6 = arith.constant dense<0.000000e+00> : vector<8x128xf32>
    %11 = tpu.matmul %8, %10, %cst_6 {dimension_numbers = #tpu.dot_dimension_numbers<[1], [0], [0], [1], [0, 0, 1, 1], [], []>} : vector<8x16xbf16>, vector<16x128xbf16>, vector<8x128xf32> -> vector<8x128xf32>
    %12 = arith.addf %1, %11 : vector<8x128xf32>
    %c1_i32 = arith.constant 1 : i32
    %13 = arith.addi %0, %c1_i32 : i32
    %c4_i32_7 = arith.constant 4 : i32
    %14 = arith.cmpi sge, %13, %c4_i32_7 : i32
    %c4_i32_8 = arith.constant 4 : i32
    %15 = arith.subi %13, %c4_i32_8 : i32
    %16 = arith.select %14, %15, %13 : i32
    %17 = arith.index_cast %16 : i32 to index
    %c0_9 = arith.constant 0 : index
    %c0_10 = arith.constant 0 : index
    %18 = vector.load %arg1[%17, %c0_9, %c0_10] : memref<4x8x16xbf16, #tpu.memory_space<vmem>>, vector<1x8x16xbf16>
    %19 = vector.shape_cast %18 : vector<1x8x16xbf16> to vector<8x16xbf16>
    %c1 = arith.constant 1 : index
    %c0_11 = arith.constant 0 : index
    %c0_12 = arith.constant 0 : index
    %20 = vector.load %arg2[%c1, %c0_11, %c0_12] : memref<4x16x128xbf16, #tpu.memory_space<vmem>>, vector<1x16x128xbf16>
    %21 = vector.shape_cast %20 : vector<1x16x128xbf16> to vector<16x128xbf16>
    %cst_13 = arith.constant dense<0.000000e+00> : vector<8x128xf32>
    %22 = tpu.matmul %19, %21, %cst_13 {dimension_numbers = #tpu.dot_dimension_numbers<[1], [0], [0], [1], [0, 0, 1, 1], [], []>} : vector<8x16xbf16>, vector<16x128xbf16>, vector<8x128xf32> -> vector<8x128xf32>
    %23 = arith.addf %12, %22 : vector<8x128xf32>
    %c2_i32 = arith.constant 2 : i32
    %24 = arith.addi %0, %c2_i32 : i32
    %c4_i32_14 = arith.constant 4 : i32
    %25 = arith.cmpi sge, %24, %c4_i32_14 : i32
    %c4_i32_15 = arith.constant 4 : i32
    %26 = arith.subi %24, %c4_i32_15 : i32
    %27 = arith.select %25, %26, %24 : i32
    %28 = arith.index_cast %27 : i32 to index
    %c0_16 = arith.constant 0 : index
    %c0_17 = arith.constant 0 : index
    %29 = vector.load %arg1[%28, %c0_16, %c0_17] : memref<4x8x16xbf16, #tpu.memory_space<vmem>>, vector<1x8x16xbf16>
    %30 = vector.shape_cast %29 : vector<1x8x16xbf16> to vector<8x16xbf16>
    %c2 = arith.constant 2 : index
    %c0_18 = arith.constant 0 : index
    %c0_19 = arith.constant 0 : index
    %31 = vector.load %arg2[%c2, %c0_18, %c0_19] : memref<4x16x128xbf16, #tpu.memory_space<vmem>>, vector<1x16x128xbf16>
    %32 = vector.shape_cast %31 : vector<1x16x128xbf16> to vector<16x128xbf16>
    %cst_20 = arith.constant dense<0.000000e+00> : vector<8x128xf32>
    %33 = tpu.matmul %30, %32, %cst_20 {dimension_numbers = #tpu.dot_dimension_numbers<[1], [0], [0], [1], [0, 0, 1, 1], [], []>} : vector<8x16xbf16>, vector<16x128xbf16>, vector<8x128xf32> -> vector<8x128xf32>
    %34 = arith.addf %23, %33 : vector<8x128xf32>
    %c3_i32 = arith.constant 3 : i32
    %35 = arith.addi %0, %c3_i32 : i32
    %c4_i32_21 = arith.constant 4 : i32
    %36 = arith.cmpi sge, %35, %c4_i32_21 : i32
    %c4_i32_22 = arith.constant 4 : i32
    %37 = arith.subi %35, %c4_i32_22 : i32
    %38 = arith.select %36, %37, %35 : i32
    %39 = arith.index_cast %38 : i32 to index
    %c0_23 = arith.constant 0 : index
    %c0_24 = arith.constant 0 : index
    %40 = vector.load %arg1[%39, %c0_23, %c0_24] : memref<4x8x16xbf16, #tpu.memory_space<vmem>>, vector<1x8x16xbf16>
    %41 = vector.shape_cast %40 : vector<1x8x16xbf16> to vector<8x16xbf16>
    %c3 = arith.constant 3 : index
    %c0_25 = arith.constant 0 : index
    %c0_26 = arith.constant 0 : index
    %42 = vector.load %arg2[%c3, %c0_25, %c0_26] : memref<4x16x128xbf16, #tpu.memory_space<vmem>>, vector<1x16x128xbf16>
    %43 = vector.shape_cast %42 : vector<1x16x128xbf16> to vector<16x128xbf16>
    %cst_27 = arith.constant dense<0.000000e+00> : vector<8x128xf32>
    %44 = tpu.matmul %41, %43, %cst_27 {dimension_numbers = #tpu.dot_dimension_numbers<[1], [0], [0], [1], [0, 0, 1, 1], [], []>} : vector<8x16xbf16>, vector<16x128xbf16>, vector<8x128xf32> -> vector<8x128xf32>
    %45 = arith.addf %34, %44 : vector<8x128xf32>
    %c0_28 = arith.constant 0 : index
    %c0_29 = arith.constant 0 : index
    %46 = vector.load %arg3[%c0_28, %c0_29] : memref<1x128xf32, #tpu.memory_space<vmem>>, vector<1x128xf32>
    %47 = vector.broadcast %46 : vector<1x128xf32> to vector<8x128xf32>
    %48 = arith.addf %45, %47 : vector<8x128xf32>
    %49 = math.tanh %48 : vector<8x128xf32>
    %50 = arith.truncf %49 : vector<8x128xf32> to vector<8x128xbf16>
    %c0_30 = arith.constant 0 : index
    %c0_31 = arith.constant 0 : index
    %51 = vector.load %arg4[%c0_30, %c0_31] : memref<8x128xbf16, #tpu.memory_space<vmem>>, vector<8x128xbf16>
    tpu.vector_store %arg4[%c0_30, %c0_31], %50 {strides = array<i32>} : memref<8x128xbf16, #tpu.memory_space<vmem>>, vector<8x128xbf16>,
    return
  }
}

</mosaic_0001>

<llo_original>
// kernel: _step_impl.1
$region0: #{_step_impl.1}
  #allocation0 [shape = 'u32[]', space=smem, size = 0x4, offset = 0x4, fixed_abs, tag = 'smem constant byte address 0x4 - core index']
  #allocation1 [shape = 'u32[144,128]{1,0:T(1,128)}', space=vmem, size = 0x12000, scoped, tag = 'internal scratch']
  #allocation2 [shape = 's32[1]{0:T(128)S(6)}', space=smem, size = 0x200, scoped, tag = 'scoped memory for _step_impl.1']
  %s0 = inlined_call_operand.<no memory space> [shape: s32[1], index: 0, kind: input, shape index: {}]
  %s1 = inlined_call_operand.vmem [shape: bf16[4,8,16], index: 1, kind: input, shape index: {}]
  %s2 = inlined_call_operand.vmem [shape: bf16[4,16,128], index: 2, kind: input, shape index: {}]
  %s3 = inlined_call_operand.vmem [shape: f32[1,128], index: 3, kind: input, shape index: {}]
  %s4 = inlined_call_operand.vmem [shape: bf16[8,128], index: 4, kind: output, shape index: {}]
  %s5 = sld [smem:[#allocation0]]
  $region26: #{_step_impl.1} parent=0
    _
  %s7 = ssub.s32 1, %s5
  %s8 = scalar_select 0, %s7, %s5
  %9 = sst [smem:[#allocation2]] %s0
  // Predicated region
  $region2: #{_step_impl.1} parent=0 // pred_check
    _
  $region3: #{_step_impl.1} parent=0 // pred_check_branch
    %11 = sbr.rel (0) target = $region5
  $region4: #{_step_impl.1} parent=0 // pred_region
    _
  $region5: #{_step_impl.1} parent=0 // pred_fallthru
    _
  // Predicated region
  $region6: #{_step_impl.1} parent=0 // pred_check
    _
  $region7: #{_step_impl.1} parent=0 // pred_check_branch
    %13 = sbr.rel (0) target = $region9
  $region8: #{_step_impl.1} parent=0 // pred_region
    _
  $region9: #{_step_impl.1} parent=0 // pred_fallthru
    _
  // Predicated region
  $region10: #{_step_impl.1} parent=0 // pred_check
    _
  $region11: #{_step_impl.1} parent=0 // pred_check_branch
    %15 = sbr.rel (0) target = $region13
  $region12: #{_step_impl.1} parent=0 // pred_region
    _
  $region13: #{_step_impl.1} parent=0 // pred_fallthru
    _
  // Predicated region
  $region14: #{_step_impl.1} parent=0 // pred_check
    _
  $region15: #{_step_impl.1} parent=0 // pred_check_branch
    %17 = sbr.rel (0) target = $region17
  $region16: #{_step_impl.1} parent=0 // pred_region
    _
  $region17: #{_step_impl.1} parent=0 // pred_fallthru
    _
  %s19 = sld [smem:[#allocation2]]
  %p20 = scmp.ge.s32.totalorder %s19, 4
  %s21 = sadd.s32 %s19, 4294967292
  %s22 = scalar_select %p20, %s21, %s19
  %s23 = smul.addr %s22, 4
  %s24 = scalar_lea.vmem %s1, %s23
  %v25 = vld [vmem:[%s24] sm:$0xf]
  %v26 = vld [vmem:[%s2] sm:$0xf]
  %v27 = vld [vmem:[%s2 + $0x4] sm:$0xf]
  %s28 = sadd.s32 %s19, 1
  %p29 = scmp.ge.s32.totalorder %s28, 4
  %s30 = sadd.s32 %s19, 4294967293
  %s31 = scalar_select %p29, %s30, %s28
  %s32 = smul.addr %s31, 4
  %s33 = scalar_lea.vmem %s1, %s32
  %v34 = vld [vmem:[%s33] sm:$0xf]
  %s35 = scalar_lea.vmem %s2, 8
  %v36 = vld [vmem:[%s35] sm:$0xf]
  %v37 = vld [vmem:[%s35 + $0x4] sm:$0xf]
  %v40 = vunpack.c.l.b16 %v36
  %v41 = vunpack.c.l.b16 %v37
  %v42 = vpack.c.b16 %v41, %v40
  %vm44 = vcmask 130048
  %v46 = vsel %vm44, %v34, 0
  %48 = vmatprep.subr.bf16.mxu0 0
  %49 = vmatpush1.bf16.msra.mxu0 0
  %50 = vmatprep.subr.bf16.mxu0 0
  %51 = vmatpush1.bf16.msra.mxu0 0
  %52 = vmatprep.subr.bf16.mxu0 0
  %53 = vmatpush1.bf16.msra.mxu0 0
  %54 = vmatprep.subr.bf16.mxu0 0
  %55 = vmatpush1.bf16.msra.mxu0 0
  %56 = vmatprep.subr.bf16.mxu0 0
  %57 = vmatpush1.bf16.msra.mxu0 0
  %58 = vmatprep.subr.bf16.mxu0 0
  %59 = vmatpush1.bf16.msra.mxu0 0
  %60 = vmatprep.subr.bf16.mxu0 0
  %61 = vmatpush1.bf16.msra.mxu0 0
  %62 = vmatprep.subr.bf16.mxu0 0
  %63 = vmatpush1.bf16.msra.mxu0 %v42
  %64 = vmatprep.subr.bf16.mxu0 0
  %65 = vmatpush2.bf16.msra.mxu0 0
  %66 = vmatprep.subr.bf16.mxu0 0
  %67 = vmatpush2.bf16.msra.mxu0 0
  %68 = vmatprep.subr.bf16.mxu0 0
  %69 = vmatpush2.bf16.msra.mxu0 0
  %70 = vmatprep.subr.bf16.mxu0 0
  %71 = vmatpush2.bf16.msra.mxu0 0
  %72 = vmatprep.subr.bf16.mxu0 0
  %73 = vmatpush2.bf16.msra.mxu0 0
  %74 = vmatprep.subr.bf16.mxu0 0
  %75 = vmatpush2.bf16.msra.mxu0 0
  %76 = vmatprep.subr.bf16.mxu0 0
  %77 = vmatpush2.bf16.msra.mxu0 0
  %78 = vmatprep.subr.bf16.mxu0 0
  %79 = vmatpush2.bf16.msra.mxu0 0
  %80 = vmatprep.mubr.bf16.mxu0 0
  %81 = vmatmul.mubr.bf16.gmra.mxu0 %v46
  %v82 = vpop.f32.mrf.mxu0
  %v83 = vadd.f32 0.0, %v82
  %v84 = vpop.f32.mrf.mxu0
  %v85 = vpop.f32.mrf.mxu0
  %v86 = vpop.f32.mrf.mxu0
  %87 = vdwg.mxu0
  %v90 = vunpack.c.l.b16 %v26
  %v91 = vunpack.c.l.b16 %v27
  %v92 = vpack.c.b16 %v91, %v90
  %v95 = vsel %vm44, %v25, 0
  %97 = vmatprep.subr.bf16.mxu0 0
  %98 = vmatpush1.bf16.msra.mxu0 0
  %99 = vmatprep.subr.bf16.mxu0 0
  %100 = vmatpush1.bf16.msra.mxu0 0
  %101 = vmatprep.subr.bf16.mxu0 0
  %102 = vmatpush1.bf16.msra.mxu0 0
  %103 = vmatprep.subr.bf16.mxu0 0
  %104 = vmatpush1.bf16.msra.mxu0 0
  %105 = vmatprep.subr.bf16.mxu0 0
  %106 = vmatpush1.bf16.msra.mxu0 0
  %107 = vmatprep.subr.bf16.mxu0 0
  %108 = vmatpush1.bf16.msra.mxu0 0
  %109 = vmatprep.subr.bf16.mxu0 0
  %110 = vmatpush1.bf16.msra.mxu0 0
  %111 = vmatprep.subr.bf16.mxu0 0
  %112 = vmatpush1.bf16.msra.mxu0 %v92
  %113 = vmatprep.subr.bf16.mxu0 0
  %114 = vmatpush2.bf16.msra.mxu0 0
  %115 = vmatprep.subr.bf16.mxu0 0
  %116 = vmatpush2.bf16.msra.mxu0 0
  %117 = vmatprep.subr.bf16.mxu0 0
  %118 = vmatpush2.bf16.msra.mxu0 0
  %119 = vmatprep.subr.bf16.mxu0 0
  %120 = vmatpush2.bf16.msra.mxu0 0
  %121 = vmatprep.subr.bf16.mxu0 0
  %122 = vmatpush2.bf16.msra.mxu0 0
  %123 = vmatprep.subr.bf16.mxu0 0
  %124 = vmatpush2.bf16.msra.mxu0 0
  %125 = vmatprep.subr.bf16.mxu0 0
  %126 = vmatpush2.bf16.msra.mxu0 0
  %127 = vmatprep.subr.bf16.mxu0 0
  %128 = vmatpush2.bf16.msra.mxu0 0
  %129 = vmatprep.mubr.bf16.mxu0 0
  %130 = vmatmul.mubr.bf16.gmra.mxu0 %v95
  %v131 = vpop.f32.mrf.mxu0
  %v132 = vadd.f32 %v83, %v131
  %v133 = vpop.f32.mrf.mxu0
  %v134 = vpop.f32.mrf.mxu0
  %v135 = vpop.f32.mrf.mxu0
  %136 = vdwg.mxu0
  %s137 = sadd.s32 %s19, 2
  %p138 = scmp.ge.s32.totalorder %s137, 4
  %s139 = sadd.s32 %s19, 4294967294
  %s140 = scalar_select %p138, %s139, %s137
  %s141 = smul.addr %s140, 4
  %s142 = scalar_lea.vmem %s1, %s141
  %v143 = vld [vmem:[%s142] sm:$0xf]
  %s144 = scalar_lea.vmem %s2, 16
  %v145 = vld [vmem:[%s144] sm:$0xf]
  %v146 = vld [vmem:[%s144 + $0x4] sm:$0xf]
  %v149 = vunpack.c.l.b16 %v145
  %v150 = vunpack.c.l.b16 %v146
  %v151 = vpack.c.b16 %v150, %v149
  %v154 = vsel %vm44, %v143, 0
  %156 = vmatprep.subr.bf16.mxu0 0
  %157 = vmatpush1.bf16.msra.mxu0 0
  %158 = vmatprep.subr.bf16.mxu0 0
  %159 = vmatpush1.bf16.msra.mxu0 0
  %160 = vmatprep.subr.bf16.mxu0 0
  %161 = vmatpush1.bf16.msra.mxu0 0
  %162 = vmatprep.subr.bf16.mxu0 0
  %163 = vmatpush1.bf16.msra.mxu0 0
  %164 = vmatprep.subr.bf16.mxu0 0
  %165 = vmatpush1.bf16.msra.mxu0 0
  %166 = vmatprep.subr.bf16.mxu0 0
  %167 = vmatpush1.bf16.msra.mxu0 0
  %168 = vmatprep.subr.bf16.mxu0 0
  %169 = vmatpush1.bf16.msra.mxu0 0
  %170 = vmatprep.subr.bf16.mxu0 0
  %171 = vmatpush1.bf16.msra.mxu0 %v151
  %172 = vmatprep.subr.bf16.mxu0 0
  %173 = vmatpush2.bf16.msra.mxu0 0
  %174 = vmatprep.subr.bf16.mxu0 0
  %175 = vmatpush2.bf16.msra.mxu0 0
  %176 = vmatprep.subr.bf16.mxu0 0
  %177 = vmatpush2.bf16.msra.mxu0 0
  %178 = vmatprep.subr.bf16.mxu0 0
  %179 = vmatpush2.bf16.msra.mxu0 0
  %180 = vmatprep.subr.bf16.mxu0 0
  %181 = vmatpush2.bf16.msra.mxu0 0
  %182 = vmatprep.subr.bf16.mxu0 0
  %183 = vmatpush2.bf16.msra.mxu0 0
  %184 = vmatprep.subr.bf16.mxu0 0
  %185 = vmatpush2.bf16.msra.mxu0 0
  %186 = vmatprep.subr.bf16.mxu0 0
  %187 = vmatpush2.bf16.msra.mxu0 0
  %188 = vmatprep.mubr.bf16.mxu0 0
  %189 = vmatmul.mubr.bf16.gmra.mxu0 %v154
  %v190 = vpop.f32.mrf.mxu0
  %v191 = vadd.f32 0.0, %v190
  %v192 = vpop.f32.mrf.mxu0
  %v193 = vpop.f32.mrf.mxu0
  %v194 = vpop.f32.mrf.mxu0
  %195 = vdwg.mxu0
  %v196 = vadd.f32 %v132, %v191
  %s197 = sadd.s32 %s19, 3
  %p198 = scmp.ge.s32.totalorder %s197, 4
  %s199 = sadd.s32 %s19, 4294967295
  %s200 = scalar_select %p198, %s199, %s197
  %s201 = smul.addr %s200, 4
  %s202 = scalar_lea.vmem %s1, %s201
  %v203 = vld [vmem:[%s202] sm:$0xf]
  %s204 = scalar_lea.vmem %s2, 24
  %v205 = vld [vmem:[%s204] sm:$0xf]
  %v206 = vld [vmem:[%s204 + $0x4] sm:$0xf]
  %v209 = vunpack.c.l.b16 %v205
  %v210 = vunpack.c.l.b16 %v206
  %v211 = vpack.c.b16 %v210, %v209
  %v214 = vsel %vm44, %v203, 0
  %216 = vmatprep.subr.bf16.mxu0 0
  %217 = vmatpush1.bf16.msra.mxu0 0
  %218 = vmatprep.subr.bf16.mxu0 0
  %219 = vmatpush1.bf16.msra.mxu0 0
  %220 = vmatprep.subr.bf16.mxu0 0
  %221 = vmatpush1.bf16.msra.mxu0 0
  %222 = vmatprep.subr.bf16.mxu0 0
  %223 = vmatpush1.bf16.msra.mxu0 0
  %224 = vmatprep.subr.bf16.mxu0 0
  %225 = vmatpush1.bf16.msra.mxu0 0
  %226 = vmatprep.subr.bf16.mxu0 0
  %227 = vmatpush1.bf16.msra.mxu0 0
  %228 = vmatprep.subr.bf16.mxu0 0
  %229 = vmatpush1.bf16.msra.mxu0 0
  %230 = vmatprep.subr.bf16.mxu0 0
  %231 = vmatpush1.bf16.msra.mxu0 %v211
  %232 = vmatprep.subr.bf16.mxu0 0
  %233 = vmatpush2.bf16.msra.mxu0 0
  %234 = vmatprep.subr.bf16.mxu0 0
  %235 = vmatpush2.bf16.msra.mxu0 0
  %236 = vmatprep.subr.bf16.mxu0 0
  %237 = vmatpush2.bf16.msra.mxu0 0
  %238 = vmatprep.subr.bf16.mxu0 0
  %239 = vmatpush2.bf16.msra.mxu0 0
  %240 = vmatprep.subr.bf16.mxu0 0
  %241 = vmatpush2.bf16.msra.mxu0 0
  %242 = vmatprep.subr.bf16.mxu0 0
  %243 = vmatpush2.bf16.msra.mxu0 0
  %244 = vmatprep.subr.bf16.mxu0 0
  %245 = vmatpush2.bf16.msra.mxu0 0
  %246 = vmatprep.subr.bf16.mxu0 0
  %247 = vmatpush2.bf16.msra.mxu0 0
  %248 = vmatprep.mubr.bf16.mxu0 0
  %249 = vmatmul.mubr.bf16.gmra.mxu0 %v214
  %v250 = vpop.f32.mrf.mxu0
  %v251 = vadd.f32 0.0, %v250
  %v252 = vpop.f32.mrf.mxu0
  %v253 = vpop.f32.mrf.mxu0
  %v254 = vpop.f32.mrf.mxu0
  %255 = vdwg.mxu0
  %v256 = vadd.f32 %v196, %v251
  %v257 = vld [vmem:[%s3] sm:$0x1]
  %v259 = vlaneseq
  %v260 = vshrl.u32 %v259, 7
  %v261 = vsub.s32 0, %v260
  %v262 = vrot.slane %v257, %v261
  %v264 = vadd.f32 %v256, %v262
  %v265 = vtanh.pop %v264
  %v266 = vpack.c.bf16 %v265, %v265
  %267 = vst [vmem:[%s4] sm:$0xf] %v266
  // Predicated region
  $region18: #{_step_impl.1} parent=0 // pred_check
    _
  $region19: #{_step_impl.1} parent=0 // pred_check_branch
    %269 = sbr.rel (0) target = $region21
  $region20: #{_step_impl.1} parent=0 // pred_region
    _
  $region21: #{_step_impl.1} parent=0 // pred_fallthru
    _
  // Predicated region
  $region22: #{_step_impl.1} parent=0 // pred_check
    _
  $region23: #{_step_impl.1} parent=0 // pred_check_branch
    %271 = sbr.rel (0) target = $region25
  $region24: #{_step_impl.1} parent=0 // pred_region
    _
  $region25: #{_step_impl.1} parent=0 // pred_fallthru
    _

</llo_original>
